<compile_context>
chip_gen: v5e
topology: v5e:2x2
jax: 0.10.0
libtpu: 0.0.40
codegen_flags: <defaults>
</compile_context>

<pallas_src>
import math

import jax
import jax.numpy as jnp
from jax.experimental import pallas as pl
from jax.experimental.pallas import tpu as pltpu


def _round_up(x, m):
    return (x + m - 1) // m * m


# ----------------------------------------------------------------------------
# Fused kernel: sinusoidal embedding -> Linear -> SiLU -> Linear
# ----------------------------------------------------------------------------
def _timestep_embedder_kernel(t_ref, freqs_ref, w1c_ref, w1s_ref, b1_ref,
                              w2_ref, b2_ref, o_ref):
    # t_ref:     (TM, 1)      f32   timesteps for this row tile (streamed)
    # freqs_ref: (1, half)    f32   resident frequency table
    # w1c_ref:   (half, Hd)   bf16  cos-half of first Linear weight (in, out)
    # w1s_ref:   (half, Hd)   bf16  sin-half of first Linear weight (in, out)
    # b1_ref:    (1, Hd)      f32
    # w2_ref:    (Hd, Hd)     bf16  second Linear weight (in, out)
    # b2_ref:    (1, Hd)      f32
    # o_ref:     (TM, Hd)     f32
    t = t_ref[...]                                   # (TM, 1)
    args = t * freqs_ref[...]                        # (TM, half) lane-broadcast

    # Split first matmul -> no (TM, 2*half) concat is materialized.
    cos_e = jnp.cos(args).astype(jnp.bfloat16)
    sin_e = jnp.sin(args).astype(jnp.bfloat16)
    h = (jnp.dot(cos_e, w1c_ref[...], preferred_element_type=jnp.float32)
         + jnp.dot(sin_e, w1s_ref[...], preferred_element_type=jnp.float32)
         + b1_ref[...])                              # f32 accumulate + f32 bias

    # SiLU in bf16 (sigmoid -> EUP slot), feeds bf16 LHS into the second matmul.
    h = h.astype(jnp.bfloat16)
    h = h * jax.nn.sigmoid(h)

    out = jnp.dot(h, w2_ref[...], preferred_element_type=jnp.float32) + b2_ref[...]
    o_ref[...] = out.astype(o_ref.dtype)


def timestep_embedder_forward(t, params, *, frequency_embedding_size=256,
                              max_period=10000.0, tm_cap=1024):
    """t: (N,) float timesteps. Returns (N, hidden) embeddings (f32)."""
    N = t.shape[0]
    half = frequency_embedding_size // 2
    hidden = params["w2"].shape[1]
    assert params["w1"].shape == (2 * half, hidden)

    # ---- row tile / grid selection -------------------------------------
    # tm: multiple of 8 (sublane constraint). If there is enough work, force
    # >= 2 grid steps (v7x megacore sharding), then grow the tile up to tm_cap.
    n8 = _round_up(N, 8)
    if n8 >= 16:
        tm = min(tm_cap, _round_up((n8 + 1) // 2, 8))
    else:
        tm = n8
    tm = max(8, _round_up(tm, 8))
    n_pad = _round_up(N, tm)

    t_pad = jnp.zeros((n_pad, 1), jnp.float32).at[:N, 0].set(t.astype(jnp.float32))

    # Constant frequency table: computed ONCE in the wrapper (not per grid step).
    freqs = jnp.exp(
        (-math.log(max_period) / half) * jnp.arange(half, dtype=jnp.float32)
    ).reshape(1, half)

    # bf16 weights (halved HBM traffic, native MXU path); f32 biases.
    w1 = params["w1"].astype(jnp.bfloat16)
    w1c, w1s = w1[:half], w1[half:]
    w2 = params["w2"].astype(jnp.bfloat16)
    b1 = params["b1"].astype(jnp.float32)
    b2 = params["b2"].astype(jnp.float32)

    grid = (n_pad // tm,)

    # Right-sized VMEM budget: resident operands + double-buffered streaming
    # tiles, plus headroom; clamp to [8 MiB, 64 MiB] (v7x per-TC capacity).
    resident_bytes = (4 * half                       # freqs f32
                      + 2 * (2 * half * hidden)      # w1 halves bf16
                      + 2 * hidden * hidden          # w2 bf16
                      + 2 * 4 * hidden)              # b1,b2 f32
    streaming_bytes = 4 * tm + 4 * tm * hidden       # t tile + out tile (f32)
    vmem_limit = int(min(max(2 * (resident_bytes + 2 * streaming_bytes)
                             + (2 << 20), 8 << 20), 64 << 20))

    flops = 2 * n_pad * (2 * half * hidden + hidden * hidden)
    transcendentals = n_pad * (2 * half + hidden)    # cos/sin + sigmoid
    bytes_accessed = (4 * n_pad * (1 + hidden)                      # t + out
                      + 4 * half + 2 * (2 * half * hidden)          # freqs + w1
                      + 2 * hidden * hidden + 4 * 2 * hidden)       # w2 + biases

    out = pl.pallas_call(
        _timestep_embedder_kernel,
        out_shape=jax.ShapeDtypeStruct((n_pad, hidden), jnp.float32),
        grid=grid,
        in_specs=[
            pl.BlockSpec((tm, 1), lambda i: (i, 0)),            # t rows (streamed)
            # Resident operands (constant block index -> fetched once).
            # TODO(synk): at real DiT widths on v7x, single-buffer these via
            # pipeline_mode=pl.Buffered(1); negligible at hidden=128/bf16.
            pl.BlockSpec((1, half), lambda i: (0, 0)),          # freqs
            pl.BlockSpec((half, hidden), lambda i: (0, 0)),     # w1 cos-half
            pl.BlockSpec((half, hidden), lambda i: (0, 0)),     # w1 sin-half
            pl.BlockSpec((1, hidden), lambda i: (0, 0)),        # b1
            pl.BlockSpec((hidden, hidden), lambda i: (0, 0)),   # w2
            pl.BlockSpec((1, hidden), lambda i: (0, 0)),        # b2
        ],
        out_specs=pl.BlockSpec((tm, hidden), lambda i: (i, 0)),
        compiler_params=pltpu.CompilerParams(
            dimension_semantics=("parallel",),   # v7x TCs split the row grid
            vmem_limit_bytes=vmem_limit,
        ),
        cost_estimate=pl.CostEstimate(
            flops=flops,
            transcendentals=transcendentals,
            bytes_accessed=bytes_accessed),
    )(t_pad, freqs, w1c, w1s, b1, w2, b2)

    return out[:N]


# ----------------------------------------------------------------------------
# Pure-JAX f32 reference mirroring the PyTorch forward (correctness check)
# ----------------------------------------------------------------------------
def reference_forward(t, params, *, frequency_embedding_size=256,
                      max_period=10000.0):
    half = frequency_embedding_size // 2
    freqs = jnp.exp(
        -math.log(max_period) * jnp.arange(half, dtype=jnp.float32) / half)
    args = t.astype(jnp.float32)[:, None] * freqs[None]
    emb = jnp.concatenate([jnp.cos(args), jnp.sin(args)], axis=-1)
    h = emb @ params["w1"] + params["b1"][0]
    h = h * jax.nn.sigmoid(h)                        # SiLU
    return h @ params["w2"] + params["b2"][0]


# ----------------------------------------------------------------------------
# Deterministic parameter init + driver
# ----------------------------------------------------------------------------
def init_params(key, frequency_embedding_size, hidden_size):
    ks = jax.random.split(key, 4)
    # nn.Linear weights stored transposed: (in_features, out_features), y = x @ W + b
    return {
        "w1": 0.05 * jax.random.normal(
            ks[0], (frequency_embedding_size, hidden_size), jnp.float32),
        "b1": 0.05 * jax.random.normal(ks[1], (1, hidden_size), jnp.float32),
        "w2": 0.05 * jax.random.normal(
            ks[2], (hidden_size, hidden_size), jnp.float32),
        "b2": 0.05 * jax.random.normal(ks[3], (1, hidden_size), jnp.float32),
    }


if __name__ == "__main__":
    N = 16                          # batch of scalar timesteps
    hidden_size = 128               # lane-dense hidden dim
    frequency_embedding_size = 256  # PyTorch default (even -> no zero-pad branch)

    key = jax.random.PRNGKey(0)
    k_t, k_p = jax.random.split(key)
    # fractional timesteps in [0, 1000), like diffusion step indices
    t = jax.random.uniform(k_t, (N,), jnp.float32) * 1000.0
    params = init_params(k_p, frequency_embedding_size, hidden_size)

    out = timestep_embedder_forward(
        t, params, frequency_embedding_size=frequency_embedding_size)
    out = jax.block_until_ready(out)

    ref = reference_forward(
        t, params, frequency_embedding_size=frequency_embedding_size)
    assert out.shape == (N, hidden_size)
    # bf16 weights/activations vs f32 reference -> loosened tolerance.
    assert jnp.max(jnp.abs(out - ref)) < 5e-2, "mismatch vs pure-JAX reference"

    print("KERNEL_OK")
</pallas_src>

<mosaic_0001>
module attributes {stable_mosaic.version = 11 : i64} {
  func.func @_timestep_embedder_kernel(%arg0: i32, %arg1: memref<8x1xf32, #tpu.memory_space<vmem>>, %arg2: memref<1x128xf32, #tpu.memory_space<vmem>>, %arg3: memref<128x128xbf16, #tpu.memory_space<vmem>>, %arg4: memref<128x128xbf16, #tpu.memory_space<vmem>>, %arg5: memref<1x128xf32, #tpu.memory_space<vmem>>, %arg6: memref<128x128xbf16, #tpu.memory_space<vmem>>, %arg7: memref<1x128xf32, #tpu.memory_space<vmem>>, %arg8: memref<8x128xf32, #tpu.memory_space<vmem>>) attributes {dimension_semantics = [#tpu.dimension_semantics<parallel>], iteration_bounds = array<i64: 2>, scalar_prefetch = 0 : i64, scratch_operands = 0 : i64, tpu.core_type = #tpu.core_type<tc>, window_params = [{transform_indices = @transform_0, window_bounds = array<i64: 8, 1>}, {pipeline_mode = #tpu.pipeline_mode<synchronous>, transform_indices = @transform_1, window_bounds = array<i64: 1, 128>}, {pipeline_mode = #tpu.pipeline_mode<synchronous>, transform_indices = @transform_2, window_bounds = array<i64: 128, 128>}, {pipeline_mode = #tpu.pipeline_mode<synchronous>, transform_indices = @transform_3, window_bounds = array<i64: 128, 128>}, {pipeline_mode = #tpu.pipeline_mode<synchronous>, transform_indices = @transform_4, window_bounds = array<i64: 1, 128>}, {pipeline_mode = #tpu.pipeline_mode<synchronous>, transform_indices = @transform_5, window_bounds = array<i64: 128, 128>}, {pipeline_mode = #tpu.pipeline_mode<synchronous>, transform_indices = @transform_6, window_bounds = array<i64: 1, 128>}, {transform_indices = @transform_7, window_bounds = array<i64: 8, 128>}]} {
    %c0 = arith.constant 0 : index
    %c0_0 = arith.constant 0 : index
    %0 = vector.load %arg1[%c0, %c0_0] : memref<8x1xf32, #tpu.memory_space<vmem>>, vector<8x1xf32>
    %c0_1 = arith.constant 0 : index
    %c0_2 = arith.constant 0 : index
    %1 = vector.load %arg2[%c0_1, %c0_2] : memref<1x128xf32, #tpu.memory_space<vmem>>, vector<1x128xf32>
    %2 = vector.broadcast %0 : vector<8x1xf32> to vector<8x128xf32>
    %3 = vector.broadcast %1 : vector<1x128xf32> to vector<8x128xf32>
    %4 = arith.mulf %2, %3 : vector<8x128xf32>
    %5 = math.cos %4 : vector<8x128xf32>
    %6 = arith.truncf %5 : vector<8x128xf32> to vector<8x128xbf16>
    %7 = math.sin %4 : vector<8x128xf32>
    %8 = arith.truncf %7 : vector<8x128xf32> to vector<8x128xbf16>
    %c0_3 = arith.constant 0 : index
    %c0_4 = arith.constant 0 : index
    %9 = vector.load %arg3[%c0_3, %c0_4] : memref<128x128xbf16, #tpu.memory_space<vmem>>, vector<128x128xbf16>
    %cst = arith.constant dense<0.000000e+00> : vector<8x128xf32>
    %10 = tpu.matmul %6, %9, %cst {dimension_numbers = #tpu.dot_dimension_numbers<[1], [0], [0], [1], [0, 0, 1, 1], [], []>} : vector<8x128xbf16>, vector<128x128xbf16>, vector<8x128xf32> -> vector<8x128xf32>
    %c0_5 = arith.constant 0 : index
    %c0_6 = arith.constant 0 : index
    %11 = vector.load %arg4[%c0_5, %c0_6] : memref<128x128xbf16, #tpu.memory_space<vmem>>, vector<128x128xbf16>
    %cst_7 = arith.constant dense<0.000000e+00> : vector<8x128xf32>
    %12 = tpu.matmul %8, %11, %cst_7 {dimension_numbers = #tpu.dot_dimension_numbers<[1], [0], [0], [1], [0, 0, 1, 1], [], []>} : vector<8x128xbf16>, vector<128x128xbf16>, vector<8x128xf32> -> vector<8x128xf32>
    %13 = arith.addf %10, %12 : vector<8x128xf32>
    %c0_8 = arith.constant 0 : index
    %c0_9 = arith.constant 0 : index
    %14 = vector.load %arg5[%c0_8, %c0_9] : memref<1x128xf32, #tpu.memory_space<vmem>>, vector<1x128xf32>
    %15 = vector.broadcast %14 : vector<1x128xf32> to vector<8x128xf32>
    %16 = arith.addf %13, %15 : vector<8x128xf32>
    %17 = arith.truncf %16 : vector<8x128xf32> to vector<8x128xbf16>
    %18 = arith.negf %17 : vector<8x128xbf16>
    %19 = math.exp %18 : vector<8x128xbf16>
    %cst_10 = arith.constant 1.000000e+00 : bf16
    %20 = vector.broadcast %cst_10 : bf16 to vector<8x128xbf16>
    %21 = arith.addf %20, %19 : vector<8x128xbf16>
    %22 = arith.divf %20, %21 : vector<8x128xbf16>
    %23 = arith.mulf %17, %22 : vector<8x128xbf16>
    %c0_11 = arith.constant 0 : index
    %c0_12 = arith.constant 0 : index
    %24 = vector.load %arg6[%c0_11, %c0_12] : memref<128x128xbf16, #tpu.memory_space<vmem>>, vector<128x128xbf16>
    %cst_13 = arith.constant dense<0.000000e+00> : vector<8x128xf32>
    %25 = tpu.matmul %23, %24, %cst_13 {dimension_numbers = #tpu.dot_dimension_numbers<[1], [0], [0], [1], [0, 0, 1, 1], [], []>} : vector<8x128xbf16>, vector<128x128xbf16>, vector<8x128xf32> -> vector<8x128xf32>
    %c0_14 = arith.constant 0 : index
    %c0_15 = arith.constant 0 : index
    %26 = vector.load %arg7[%c0_14, %c0_15] : memref<1x128xf32, #tpu.memory_space<vmem>>, vector<1x128xf32>
    %27 = vector.broadcast %26 : vector<1x128xf32> to vector<8x128xf32>
    %28 = arith.addf %25, %27 : vector<8x128xf32>
    %c0_16 = arith.constant 0 : index
    %c0_17 = arith.constant 0 : index
    %29 = vector.load %arg8[%c0_16, %c0_17] : memref<8x128xf32, #tpu.memory_space<vmem>>, vector<8x128xf32>
    tpu.vector_store %arg8[%c0_16, %c0_17], %28 {strides = array<i32>} : memref<8x128xf32, #tpu.memory_space<vmem>>, vector<8x128xf32>,
    return
  }
  func.func @transform_0(%arg0: i32) -> (i32, i32) {
    %c0_i32 = arith.constant 0 : i32
    %c0_i32_0 = arith.constant 0 : i32
    return %arg0, %c0_i32 : i32, i32
  }
  func.func @transform_1(%arg0: i32) -> (i32, i32) {
    %c0_i32 = arith.constant 0 : i32
    %c0_i32_0 = arith.constant 0 : i32
    %c0_i32_1 = arith.constant 0 : i32
    return %c0_i32, %c0_i32_0 : i32, i32
  }
  func.func @transform_2(%arg0: i32) -> (i32, i32) {
    %c0_i32 = arith.constant 0 : i32
    %c0_i32_0 = arith.constant 0 : i32
    %c0_i32_1 = arith.constant 0 : i32
    return %c0_i32, %c0_i32_0 : i32, i32
  }
  func.func @transform_3(%arg0: i32) -> (i32, i32) {
    %c0_i32 = arith.constant 0 : i32
    %c0_i32_0 = arith.constant 0 : i32
    %c0_i32_1 = arith.constant 0 : i32
    return %c0_i32, %c0_i32_0 : i32, i32
  }
  func.func @transform_4(%arg0: i32) -> (i32, i32) {
    %c0_i32 = arith.constant 0 : i32
    %c0_i32_0 = arith.constant 0 : i32
    %c0_i32_1 = arith.constant 0 : i32
    return %c0_i32, %c0_i32_0 : i32, i32
  }
  func.func @transform_5(%arg0: i32) -> (i32, i32) {
    %c0_i32 = arith.constant 0 : i32
    %c0_i32_0 = arith.constant 0 : i32
    %c0_i32_1 = arith.constant 0 : i32
    return %c0_i32, %c0_i32_0 : i32, i32
  }
  func.func @transform_6(%arg0: i32) -> (i32, i32) {
    %c0_i32 = arith.constant 0 : i32
    %c0_i32_0 = arith.constant 0 : i32
    %c0_i32_1 = arith.constant 0 : i32
    return %c0_i32, %c0_i32_0 : i32, i32
  }
  func.func @transform_7(%arg0: i32) -> (i32, i32) {
    %c0_i32 = arith.constant 0 : i32
    %c0_i32_0 = arith.constant 0 : i32
    return %arg0, %c0_i32 : i32, i32
  }
}

</mosaic_0001>

<llo_original>
// kernel: tpu_custom_call.1
$region0: #{tpu_custom_call.1}
  #allocation0 [shape = 'u32[]', space=smem, size = 0x4, offset = 0x4, fixed_abs, tag = 'smem constant byte address 0x4 - core index']
  #allocation1 [shape = 'u32[72,128]{1,0:T(1,128)}', space=vmem, size = 0x9000, scoped, tag = 'internal scratch']
  %s0 = inlined_call_operand.vmem [shape: f32[16,1], index: 0, kind: input, shape index: {}]
  %s1 = inlined_call_operand.vmem [shape: f32[1,128], index: 1, kind: input, shape index: {}]
  %s2 = inlined_call_operand.hbm [shape: bf16[128,128], index: 2, kind: input, shape index: {}]
  %s3 = inlined_call_operand.hbm [shape: bf16[128,128], index: 3, kind: input, shape index: {}]
  %s4 = inlined_call_operand.vmem [shape: f32[1,128], index: 4, kind: input, shape index: {}]
  %s5 = inlined_call_operand.hbm [shape: bf16[128,128], index: 5, kind: input, shape index: {}]
  %s6 = inlined_call_operand.vmem [shape: f32[1,128], index: 6, kind: input, shape index: {}]
  %s7 = inlined_call_operand.hbm [shape: f32[16,128], index: 7, kind: output, shape index: {}]
  %s8 = sld [smem:[#allocation0]]
  $region73: #{tpu_custom_call.1} parent=0
    _
  %s10 = ssub.s32 1, %s8
  %s11 = scalar_select 0, %s10, %s8
  $region1: #{tpu_custom_call.1} parent=0
    #allocation2 [shape = 'u8[32768]{0}', space=vmem, size = 0x8000, scoped, tag = 'input window, operand 2, single buffered']
    #allocation3 [shape = 's32[2]{0}', space=sflag, size = 0x8, scoped, tag = 'scoped memory for tpu_custom_call.1']
    #allocation4 [shape = 's32[2]{0}', space=sflag, size = 0x8, scoped, tag = 'scoped memory for tpu_custom_call.1']
    #allocation5 [shape = 'u8[32768]{0}', space=vmem, size = 0x8000, scoped, tag = 'input window, operand 3, single buffered']
    #allocation6 [shape = 's32[1]{0}', space=sflag, size = 0x4, scoped, tag = 'scoped memory for tpu_custom_call.1']
    #allocation7 [shape = 'u8[32768]{0}', space=vmem, size = 0x8000, scoped, tag = 'input window, operand 5, single buffered']
    #allocation8 [shape = 'u8[8192]{0}', space=vmem, size = 0x2000, scoped, tag = 'output window, operand 0']
    %12 = vsyncpa [#allocation3], 0
    %13 = vsyncpa [#allocation6], 0
    %14 = vsyncpa [#allocation4], 0
    %s15 = scalar_lea.sflag [#allocation4], 1
    %16 = vsyncpa %s15, 0
    loop: start=0, step=1, limit=4
    $region2: #{tpu_custom_call.1} parent=1 // loop_pre_header
      _
    $region3: #{tpu_custom_call.1} parent=1 // loop_header
      %s18 = sphi 0, %s22
      %p19 = scmp.ge.s32.totalorder %s18, 4
      %s28 = sphi 0, %s30
      %s31 = sphi 0, %s28
      %s32 = sphi 0, %s31
      %s48 = sphi 0, %s32
      %s52 = sphi 0, %s52
      %s54 = sphi 0, %s52
      %s55 = sphi 0, %s54
      %s69 = sphi 0, %s55
      %s73 = sphi 0, %s73
      %s75 = sphi 0, %s73
      %s76 = sphi 0, %s75
      %s90 = sphi 0, %s76
      %s94 = sphi 0, %s94
      %s96 = sphi 0, %s94
      %s97 = sphi 0, %s96
      %s111 = sphi 0, %s97
      %s115 = sphi 0, %s115
      %s117 = sphi 0, %s115
      %s118 = sphi 0, %s117
      %s132 = sphi 0, %s118
      %s136 = sphi 0, %s136
      %s138 = sphi 0, %s136
      %s139 = sphi 0, %s138
      %s153 = sphi 0, %s139
      %s157 = sphi 0, %s157
      %s159 = sphi 0, %s157
      %s160 = sphi 0, %s159
      %s174 = sphi 0, %s160
      %s180 = sphi 0, %s182
      %s183 = sphi 0, %s180
      %s184 = sphi 0, %s183
      %s200 = sphi 0, %s184
    $region4: #{tpu_custom_call.1} parent=1 // loop_header_branch
      %21 = sbr.rel (%p19) target = $region8
    $region5: #{tpu_custom_call.1} parent=1 // loop_body
      %s23 = ssub.s32 %s18, 1
      %s24 = ssub.s32 %s18, 2
      %s25 = sadd.s32 %s18, 1
      %s26 = ssub.s32 %s18, %s25
      %p27 = scmp.eq.s32.totalorder %s26, 0
      %s29 = sadd.s32 %s28, 1
      %s30 = scalar_select %p27, %s28, %s29
      %p33 = pneg %p27
      %p34 = scmp.eq.s32.totalorder %s18, 1
      %p35 = por %p33, %p34
      %p36 = scmp.ne.s32.totalorder %s28, %s31
      %p37 = scmp.eq.s32.totalorder %s18, 0
      %p38 = por %p36, %p37
      %p39 = scmp.ne.s32.totalorder %s28, %s31
      %p40 = scmp.eq.s32.totalorder %s23, 1
      %p41 = por %p39, %p40
      %p42 = scmp.ne.s32.totalorder %s31, %s32
      %p43 = scmp.eq.s32.totalorder %s23, 0
      %p44 = por %p42, %p43
      %p45 = scmp.ne.s32.totalorder %s31, %s32
      %p46 = scmp.eq.s32.totalorder %s24, 1
      %p47 = por %p45, %p46
      %p49 = scmp.ne.s32.totalorder %s32, %s48
      %p50 = scmp.eq.s32.totalorder %s24, 0
      %p51 = por %p49, %p50
      %s53 = sadd.s32 %s52, 1
      %p56 = scmp.eq.s32.totalorder %s18, 1
      %p57 = scmp.ne.s32.totalorder %s52, %s54
      %p58 = scmp.eq.s32.totalorder %s18, 0
      %p59 = por %p57, %p58
      %p60 = scmp.ne.s32.totalorder %s52, %s54
      %p61 = scmp.eq.s32.totalorder %s23, 1
      %p62 = por %p60, %p61
      %p63 = scmp.ne.s32.totalorder %s54, %s55
      %p64 = scmp.eq.s32.totalorder %s23, 0
      %p65 = por %p63, %p64
      %p66 = scmp.ne.s32.totalorder %s54, %s55
      %p67 = scmp.eq.s32.totalorder %s24, 1
      %p68 = por %p66, %p67
      %p70 = scmp.ne.s32.totalorder %s55, %s69
      %p71 = scmp.eq.s32.totalorder %s24, 0
      %p72 = por %p70, %p71
      %s74 = sadd.s32 %s73, 1
      %p77 = scmp.eq.s32.totalorder %s18, 1
      %p78 = scmp.ne.s32.totalorder %s73, %s75
      %p79 = scmp.eq.s32.totalorder %s18, 0
      %p80 = por %p78, %p79
      %p81 = scmp.ne.s32.totalorder %s73, %s75
      %p82 = scmp.eq.s32.totalorder %s23, 1
      %p83 = por %p81, %p82
      %p84 = scmp.ne.s32.totalorder %s75, %s76
      %p85 = scmp.eq.s32.totalorder %s23, 0
      %p86 = por %p84, %p85
      %p87 = scmp.ne.s32.totalorder %s75, %s76
      %p88 = scmp.eq.s32.totalorder %s24, 1
      %p89 = por %p87, %p88
      %p91 = scmp.ne.s32.totalorder %s76, %s90
      %p92 = scmp.eq.s32.totalorder %s24, 0
      %p93 = por %p91, %p92
      %s95 = sadd.s32 %s94, 1
      %p98 = scmp.eq.s32.totalorder %s18, 1
      %p99 = scmp.ne.s32.totalorder %s94, %s96
      %p100 = scmp.eq.s32.totalorder %s18, 0
      %p101 = por %p99, %p100
      %p102 = scmp.ne.s32.totalorder %s94, %s96
      %p103 = scmp.eq.s32.totalorder %s23, 1
      %p104 = por %p102, %p103
      %p105 = scmp.ne.s32.totalorder %s96, %s97
      %p106 = scmp.eq.s32.totalorder %s23, 0
      %p107 = por %p105, %p106
      %p108 = scmp.ne.s32.totalorder %s96, %s97
      %p109 = scmp.eq.s32.totalorder %s24, 1
      %p110 = por %p108, %p109
      %p112 = scmp.ne.s32.totalorder %s97, %s111
      %p113 = scmp.eq.s32.totalorder %s24, 0
      %p114 = por %p112, %p113
      %s116 = sadd.s32 %s115, 1
      %p119 = scmp.eq.s32.totalorder %s18, 1
      %p120 = scmp.ne.s32.totalorder %s115, %s117
      %p121 = scmp.eq.s32.totalorder %s18, 0
      %p122 = por %p120, %p121
      %p123 = scmp.ne.s32.totalorder %s115, %s117
      %p124 = scmp.eq.s32.totalorder %s23, 1
      %p125 = por %p123, %p124
      %p126 = scmp.ne.s32.totalorder %s117, %s118
      %p127 = scmp.eq.s32.totalorder %s23, 0
      %p128 = por %p126, %p127
      %p129 = scmp.ne.s32.totalorder %s117, %s118
      %p130 = scmp.eq.s32.totalorder %s24, 1
      %p131 = por %p129, %p130
      %p133 = scmp.ne.s32.totalorder %s118, %s132
      %p134 = scmp.eq.s32.totalorder %s24, 0
      %p135 = por %p133, %p134
      %s137 = sadd.s32 %s136, 1
      %p140 = scmp.eq.s32.totalorder %s18, 1
      %p141 = scmp.ne.s32.totalorder %s136, %s138
      %p142 = scmp.eq.s32.totalorder %s18, 0
      %p143 = por %p141, %p142
      %p144 = scmp.ne.s32.totalorder %s136, %s138
      %p145 = scmp.eq.s32.totalorder %s23, 1
      %p146 = por %p144, %p145
      %p147 = scmp.ne.s32.totalorder %s138, %s139
      %p148 = scmp.eq.s32.totalorder %s23, 0
      %p149 = por %p147, %p148
      %p150 = scmp.ne.s32.totalorder %s138, %s139
      %p151 = scmp.eq.s32.totalorder %s24, 1
      %p152 = por %p150, %p151
      %p154 = scmp.ne.s32.totalorder %s139, %s153
      %p155 = scmp.eq.s32.totalorder %s24, 0
      %p156 = por %p154, %p155
      %s158 = sadd.s32 %s157, 1
      %p161 = scmp.eq.s32.totalorder %s18, 1
      %p162 = scmp.ne.s32.totalorder %s157, %s159
      %p163 = scmp.eq.s32.totalorder %s18, 0
      %p164 = por %p162, %p163
      %p165 = scmp.ne.s32.totalorder %s157, %s159
      %p166 = scmp.eq.s32.totalorder %s23, 1
      %p167 = por %p165, %p166
      %p168 = scmp.ne.s32.totalorder %s159, %s160
      %p169 = scmp.eq.s32.totalorder %s23, 0
      %p170 = por %p168, %p169
      %p171 = scmp.ne.s32.totalorder %s159, %s160
      %p172 = scmp.eq.s32.totalorder %s24, 1
      %p173 = por %p171, %p172
      %p175 = scmp.ne.s32.totalorder %s160, %s174
      %p176 = scmp.eq.s32.totalorder %s24, 0
      %p177 = por %p175, %p176
      %s178 = ssub.s32 %s18, %s25
      %p179 = scmp.eq.s32.totalorder %s178, 0
      %s181 = sadd.s32 %s180, 1
      %s182 = scalar_select %p179, %s180, %s181
      %p185 = pneg %p179
      %p186 = scmp.eq.s32.totalorder %s18, 1
      %p187 = por %p185, %p186
      %p188 = scmp.ne.s32.totalorder %s180, %s183
      %p189 = scmp.eq.s32.totalorder %s18, 0
      %p190 = por %p188, %p189
      %p191 = scmp.ne.s32.totalorder %s180, %s183
      %p192 = scmp.eq.s32.totalorder %s23, 1
      %p193 = por %p191, %p192
      %p194 = scmp.ne.s32.totalorder %s183, %s184
      %p195 = scmp.eq.s32.totalorder %s23, 0
      %p196 = por %p194, %p195
      %p197 = scmp.ne.s32.totalorder %s183, %s184
      %p198 = scmp.eq.s32.totalorder %s24, 1
      %p199 = por %p197, %p198
      %p201 = scmp.ne.s32.totalorder %s184, %s200
      %p202 = scmp.eq.s32.totalorder %s24, 0
      %p203 = por %p201, %p202
      %p204 = scmp.le.s32.totalorder 1, %s18
      %p205 = scmp.lt.s32.totalorder %s18, 3
      %p206 = pnand %p204, %p205
      %p207 = pneg %p206
      // Predicated region
      $region9: #{tpu_custom_call.1} parent=5 // pred_check
        _
      $region10: #{tpu_custom_call.1} parent=5 // pred_check_branch
        %209 = sbr.rel (%p206) target = $region12
      $region11: #{tpu_custom_call.1} parent=5 // pred_region
        %s210 = ssub.s32 %s18, 1
        // Predicated region
        $region13: #{tpu_custom_call.1} parent=11 // pred_check
          %p211 = pneg %p65
        $region14: #{tpu_custom_call.1} parent=11 // pred_check_branch
          %213 = sbr.rel (%p211) target = $region16
        $region15: #{tpu_custom_call.1} parent=11 // pred_region
          _
        $region16: #{tpu_custom_call.1} parent=11 // pred_fallthru
          _
        // Predicated region
        $region17: #{tpu_custom_call.1} parent=11 // pred_check
          %p214 = pneg %p86
        $region18: #{tpu_custom_call.1} parent=11 // pred_check_branch
          %216 = sbr.rel (%p214) target = $region20
        $region19: #{tpu_custom_call.1} parent=11 // pred_region
          %218 = vsyncadd [#allocation3], 0
          %s219 = sshll.u32 %s2, 4
          %s220 = int_to_ptr.hbm [resolvable:$true] %s219
          %s221 = sshll.u32 [#allocation2], 4
          %s222 = int_to_ptr.vmem [resolvable:$true] %s221
          %227 = dma.hbm_to_vmem [thread:$0]  %s220, 1024, %s222, [#allocation3], 64, 64, 4
        $region20: #{tpu_custom_call.1} parent=11 // pred_fallthru
          _
        // Predicated region
        $region21: #{tpu_custom_call.1} parent=11 // pred_check
          %p228 = pneg %p107
        $region22: #{tpu_custom_call.1} parent=11 // pred_check_branch
          %230 = sbr.rel (%p228) target = $region24
        $region23: #{tpu_custom_call.1} parent=11 // pred_region
          %232 = vsyncadd [#allocation6], 0
          %s233 = sshll.u32 %s3, 4
          %s234 = int_to_ptr.hbm [resolvable:$true] %s233
          %s235 = sshll.u32 [#allocation5], 4
          %s236 = int_to_ptr.vmem [resolvable:$true] %s235
          %241 = dma.hbm_to_vmem [thread:$0]  %s234, 1024, %s236, [#allocation6], 64, 64, 4
        $region24: #{tpu_custom_call.1} parent=11 // pred_fallthru
          _
        // Predicated region
        $region25: #{tpu_custom_call.1} parent=11 // pred_check
          %p242 = pneg %p128
        $region26: #{tpu_custom_call.1} parent=11 // pred_check_branch
          %244 = sbr.rel (%p242) target = $region28
        $region27: #{tpu_custom_call.1} parent=11 // pred_region
          _
        $region28: #{tpu_custom_call.1} parent=11 // pred_fallthru
          _
        // Predicated region
        $region29: #{tpu_custom_call.1} parent=11 // pred_check
          %p245 = pneg %p149
        $region30: #{tpu_custom_call.1} parent=11 // pred_check_branch
          %247 = sbr.rel (%p245) target = $region32
        $region31: #{tpu_custom_call.1} parent=11 // pred_region
          %249 = vsyncadd [#allocation6], 0
          %s250 = sshll.u32 %s5, 4
          %s251 = int_to_ptr.hbm [resolvable:$true] %s250
          %s252 = sshll.u32 [#allocation7], 4
          %s253 = int_to_ptr.vmem [resolvable:$true] %s252
          %258 = dma.hbm_to_vmem [thread:$0]  %s251, 1024, %s253, [#allocation6], 64, 64, 4
        $region32: #{tpu_custom_call.1} parent=11 // pred_fallthru
          _
        // Predicated region
        $region33: #{tpu_custom_call.1} parent=11 // pred_check
          %p259 = pneg %p170
        $region34: #{tpu_custom_call.1} parent=11 // pred_check_branch
          %261 = sbr.rel (%p259) target = $region36
        $region35: #{tpu_custom_call.1} parent=11 // pred_region
          _
        $region36: #{tpu_custom_call.1} parent=11 // pred_fallthru
          _
      $region12: #{tpu_custom_call.1} parent=5 // pred_fallthru
        _
      %p262 = scmp.lt.s32.totalorder %s18, 2
      // Predicated region
      $region37: #{tpu_custom_call.1} parent=5 // pred_check
        %p263 = pneg %p262
      $region38: #{tpu_custom_call.1} parent=5 // pred_check_branch
        %265 = sbr.rel (%p263) target = $region40
      $region39: #{tpu_custom_call.1} parent=5 // pred_region
        // Predicated region
        $region41: #{tpu_custom_call.1} parent=39 // pred_check
          %p266 = pneg %p38
        $region42: #{tpu_custom_call.1} parent=39 // pred_check_branch
          %268 = sbr.rel (%p266) target = $region44
        $region43: #{tpu_custom_call.1} parent=39 // pred_region
          %p269 = scmp.lt.s32.totalorder %s18, 1
          %s270 = scalar_select %p269, %s18, 1
          %s271 = smul.addr %s270, 8
          %s272 = scalar_lea.vmem %s0, %s271
        $region44: #{tpu_custom_call.1} parent=39 // pred_fallthru
          _
      $region40: #{tpu_custom_call.1} parent=5 // pred_fallthru
        _
      %p273 = scmp.le.s32.totalorder 1, %s18
      %p274 = scmp.lt.s32.totalorder %s18, 3
      %p275 = pnand %p273, %p274
      %p276 = pneg %p275
      // Predicated region
      $region45: #{tpu_custom_call.1} parent=5 // pred_check
        _
      $region46: #{tpu_custom_call.1} parent=5 // pred_check_branch
        %278 = sbr.rel (%p275) target = $region48
      $region47: #{tpu_custom_call.1} parent=5 // pred_region
        %s279 = ssub.s32 %s18, 1
        // Predicated region
        $region49: #{tpu_custom_call.1} parent=47 // pred_check
          %p280 = pneg %p86
        $region50: #{tpu_custom_call.1} parent=47 // pred_check_branch
          %282 = sbr.rel (%p280) target = $region52
        $region51: #{tpu_custom_call.1} parent=47 // pred_region
          %284 = dma.done [#allocation3], 1024
        $region52: #{tpu_custom_call.1} parent=47 // pred_fallthru
          _
        // Predicated region
        $region53: #{tpu_custom_call.1} parent=47 // pred_check
          %p285 = pneg %p107
        $region54: #{tpu_custom_call.1} parent=47 // pred_check_branch
          %287 = sbr.rel (%p285) target = $region56
        $region55: #{tpu_custom_call.1} parent=47 // pred_region
          %289 = dma.done [#allocation6], 1024
        $region56: #{tpu_custom_call.1} parent=47 // pred_fallthru
          _
        // Predicated region
        $region57: #{tpu_custom_call.1} parent=47 // pred_check
          %p290 = pneg %p149
        $region58: #{tpu_custom_call.1} parent=47 // pred_check_branch
          %292 = sbr.rel (%p290) target = $region60
        $region59: #{tpu_custom_call.1} parent=47 // pred_region
          %294 = dma.done [#allocation6], 1024
        $region60: #{tpu_custom_call.1} parent=47 // pred_fallthru
          _
        %p295 = scmp.lt.s32.totalorder %s23, 1
        %s296 = scalar_select %p295, %s23, 1
        %s297 = smul.addr %s296, 8
        %s298 = scalar_lea.vmem %s0, %s297
        %p299 = pneg %p44
        %p300 = pneg %p41
        %p301 = pneg %p65
        %p302 = pneg %p62
        %p303 = pneg %p86
        %p304 = pneg %p83
        %p305 = pneg %p107
        %p306 = pneg %p104
        %p307 = pneg %p128
        %p308 = pneg %p125
        %p309 = pneg %p149
        %p310 = pneg %p146
        %p311 = pneg %p170
        %p312 = pneg %p167
        %p313 = pneg %p196
        %p314 = pneg %p193
        %s315 = sand.u32 %s183, 1
        %s316 = scalar_lea.sflag [#allocation4], %s315
        %s317 = sand.u32 %s183, 1
        %s318 = smul.addr %s317, 8
        %s319 = scalar_lea.vmem [#allocation8], %s318
        %p320 = scmp.lt.s32.totalorder %s23, 1
        %s321 = scalar_select %p320, %s23, 1
        %s322 = smul.addr %s321, 8
        %s323 = scalar_lea.vmem %s0, %s322
        %v325 = vld [vmem:[%s323] sm:$0xff]
        %v326 = vld [vmem:[%s1] sm:$0x1]
        %328 = vset.pattern.permute.xlu0 0
        %329 = vperm.xlu0 %328, %v325
        %v330 = vpop.permute.xlu0 %329
        %v333 = vperm.slane %v326, 0
        %v335 = vmul.f32 %v330, %v333
        %v336 = vand.u32 2147483647, %v335
        %vm337 = vcmp.le.f32.partialorder %v336, 0.7853982
        %vm338 = vcmp.lt.s32.totalorder %v335, 0
        %v339 = vand.u32 %v335, 2139095040
        %v340 = vshrl.u32 %v339, 23
        %v341 = vsub.s32 %v340, 127
        %v342 = vand.u32 2147483647, %v335
        %v343 = vand.u32 %v342, 8388607
        %v344 = vor.u32 %v343, 8388608
        %v345 = vsub.s32 0, %v344
        %v346 = vadd.s32 %v341, 1
        %vm347 = vcmp.gt.s32.totalorder %v346, 0
        %v348 = vsel %vm347, %v346, 0
        %v349 = vshrl.u32 %v348, 5
        %v350 = vand.u32 %v348, 31
        %v351 = vsub.s32 32, %v350
        %v352 = vshrl.u32 683565275, %v351
        %v353 = vshll.u32 683565275, %v350
        %v354 = vshrl.u32 2475754826, %v351
        %v355 = vor.u32 %v353, %v354
        %v356 = vshll.u32 2475754826, %v350
        %v357 = vshrl.u32 2131351028, %v351
        %v358 = vor.u32 %v356, %v357
        %v359 = vshll.u32 2131351028, %v350
        %v360 = vshrl.u32 2102212464, %v351
        %v361 = vor.u32 %v359, %v360
        %v362 = vshll.u32 2102212464, %v350
        %v363 = vshrl.u32 920167782, %v351
        %v364 = vor.u32 %v362, %v363
        %v365 = vshll.u32 920167782, %v350
        %v366 = vshrl.u32 1326507024, %v351
        %v367 = vor.u32 %v365, %v366
        %vm368 = vcmp.lt.s32.totalorder %v349, 1
        %vm369 = vcmp.lt.s32.totalorder %v349, 2
        %vm370 = vcmp.lt.s32.totalorder %v349, 3
        %vm371 = vcmp.lt.s32.totalorder %v349, 4
        %v372 = vsel %vm368, %v352, %v355
        %v373 = vsel %vm371, %v361, 2102212464
        %v374 = vsel %vm370, %v358, %v373
        %v375 = vsel %vm369, %v372, %v374
        %v376 = vsel %vm368, %v355, %v358
        %v377 = vsel %vm371, %v364, 920167782
        %v378 = vsel %vm370, %v361, %v377
        %v379 = vsel %vm369, %v376, %v378
        %v380 = vsel %vm368, %v358, %v361
        %v381 = vsel %vm371, %v367, 1326507024
        %v382 = vsel %vm370, %v364, %v381
        %v383 = vsel %vm369, %v380, %v382
        %v384 = vshll.u32 %v344, 8
        %v385 = vand.u32 %v384, 65535
        %v386 = vshrl.u32 %v384, 16
        %v387 = vand.u32 %v383, 65535
        %v388 = vshrl.u32 %v383, 16
        %v389 = vmul.u32 %v385, %v387
        %v390 = vmul.u32 %v385, %v388
        %v391 = vmul.u32 %v386, %v387
        %v392 = vmul.u32 %v386, %v388
        %v393 = vshll.u32 %v390, 16
        %v394 = vshrl.u32 %v390, 16
        %v395 = vshll.u32 %v391, 16
        %v396 = vshrl.u32 %v391, 16
        %vm397 = vc.u32 %v389, %v393
        %v398 = vsel %vm397, 1, 0
        %v399 = vadd.s32 %v389, %v393
        %v400 = vadd.s32 %v392, %v398
        %vm401 = vc.u32 %v399, %v395
        %v402 = vsel %vm401, 1, 0
        %v403 = vadd.s32 %v399, %v395
        %v404 = vadd.s32 %v400, %v402
        %v405 = vadd.s32 %v404, %v394
        %v406 = vadd.s32 %v405, %v396
        %v407 = vand.u32 %v384, 65535
        %v408 = vshrl.u32 %v384, 16
        %v409 = vand.u32 %v379, 65535
        %v410 = vshrl.u32 %v379, 16
        %v411 = vmul.u32 %v407, %v409
        %v412 = vmul.u32 %v407, %v410
        %v413 = vmul.u32 %v408, %v409
        %v414 = vmul.u32 %v408, %v410
        %v415 = vshll.u32 %v412, 16
        %v416 = vshrl.u32 %v412, 16
        %v417 = vshll.u32 %v413, 16
        %v418 = vshrl.u32 %v413, 16
        %vm419 = vc.u32 %v411, %v415
        %v420 = vsel %vm419, 1, 0
        %v421 = vadd.s32 %v411, %v415
        %v422 = vadd.s32 %v414, %v420
        %vm423 = vc.u32 %v421, %v417
        %v424 = vsel %vm423, 1, 0
        %v425 = vadd.s32 %v421, %v417
        %v426 = vadd.s32 %v422, %v424
        %v427 = vadd.s32 %v426, %v416
        %v428 = vadd.s32 %v427, %v418
        %v429 = vmul.u32 %v384, %v375
        %v430 = vadd.s32 %v406, %v425
        %vm431 = vc.u32 %v406, %v425
        %v432 = vadd.s32 %v428, 1
        %v433 = vsel %vm431, %v432, %v428
        %v434 = vadd.s32 %v429, %v433
        %v435 = vadd.s32 %v434, 536870912
        %v436 = vshrl.u32 %v435, 30
        %v437 = vshll.u32 %v436, 30
        %v438 = vsub.s32 %v434, %v437
        %vm439 = vcmp.lt.s32.totalorder %v438, 0
        %v440 = vsub.s32 0, %v438
        %v441 = vsel %vm439, %v440, %v438
        %v442 = vclz %v441
        %v443 = vsub.s32 %v442, 2
        %vm444 = vcmp.gt.s32.totalorder 0, %v443
        %v445 = vsel %vm444, 0, %v443
        %v446 = vsub.s32 32, %v445
        %v447 = vshll.u32 %v438, %v445
        %v448 = vshrl.u32 %v430, %v446
        %v449 = vor.u32 %v447, %v448
        %v450 = vsub.s32 4294967266, %v445
        %v451 = vadd.s32 %v450, 127
        %v452 = vshll.u32 %v451, 23
        %v453 = vor.u32 4788187, %v452
        %v454 = vand.u32 2147483647, %v453
        %v456 = vcvt.s32.f32 %v449
        %v457 = vmul.f32 %v456, %v454
        %v458 = vxor.u32 %v457, 2147483648
        %v459 = vsel %vm338, %v458, %v457
        %v460 = vsub.s32 4, %v436
        %v461 = vsel %vm338, %v460, %v436
        %v462 = vsel %vm337, %v335, %v459
        %v463 = vsel %vm337, 0, %v461
        %v464 = vmul.f32 %v462, %v462
        %v465 = vmul.f32 %v464, -0.001358992
        %v466 = vadd.f32 %v465, 0.041655596
        %v467 = vmul.f32 %v464, %v466
        %v468 = vadd.f32 %v467, -0.4999988
        %v469 = vmul.f32 %v464, %v468
        %v470 = vadd.f32 1.0, %v469
        %v471 = vmul.f32 %v462, %v462
        %v472 = vmul.f32 %v471, -0.00019511016
        %v473 = vadd.f32 %v472, 0.008332121
        %v474 = vmul.f32 %v471, %v473
        %v475 = vadd.f32 %v474, -0.16666654
        %v476 = vmul.f32 %v471, %v475
        %v477 = vadd.f32 %v476, 1.0
        %v478 = vmul.f32 %v477, %v462
        %vm479 = vweird.f32 %v335
        %v480 = vand.u32 %v463, 3
        %vm481 = vcmp.lt.s32.totalorder %v480, 2
        %vm482 = vcmp.eq.s32.totalorder %v480, 0
        %v483 = vxor.u32 %v478, 2147483648
        %v484 = vsel %vm482, %v470, %v483
        %vm485 = vcmp.eq.s32.totalorder %v480, 2
        %v486 = vxor.u32 %v470, 2147483648
        %v487 = vsel %vm485, %v486, %v478
        %v488 = vsel %vm481, %v484, %v487
        %v489 = vsel %vm479, nan, %v488
        %v490 = vpack.c.bf16 %v489, %v489
        %v491 = vand.u32 2147483647, %v335
        %vm492 = vcmp.le.f32.partialorder %v491, 0.7853982
        %vm493 = vcmp.lt.s32.totalorder %v335, 0
        %v494 = vand.u32 %v335, 2139095040
        %v495 = vshrl.u32 %v494, 23
        %v496 = vsub.s32 %v495, 127
        %v497 = vand.u32 2147483647, %v335
        %v498 = vand.u32 %v497, 8388607
        %v499 = vor.u32 %v498, 8388608
        %v500 = vsub.s32 0, %v499
        %v501 = vadd.s32 %v496, 1
        %vm502 = vcmp.gt.s32.totalorder %v501, 0
        %v503 = vsel %vm502, %v501, 0
        %v504 = vshrl.u32 %v503, 5
        %v505 = vand.u32 %v503, 31
        %v506 = vsub.s32 32, %v505
        %v507 = vshrl.u32 683565275, %v506
        %v508 = vshll.u32 683565275, %v505
        %v509 = vshrl.u32 2475754826, %v506
        %v510 = vor.u32 %v508, %v509
        %v511 = vshll.u32 2475754826, %v505
        %v512 = vshrl.u32 2131351028, %v506
        %v513 = vor.u32 %v511, %v512
        %v514 = vshll.u32 2131351028, %v505
        %v515 = vshrl.u32 2102212464, %v506
        %v516 = vor.u32 %v514, %v515
        %v517 = vshll.u32 2102212464, %v505
        %v518 = vshrl.u32 920167782, %v506
        %v519 = vor.u32 %v517, %v518
        %v520 = vshll.u32 920167782, %v505
        %v521 = vshrl.u32 1326507024, %v506
        %v522 = vor.u32 %v520, %v521
        %vm523 = vcmp.lt.s32.totalorder %v504, 1
        %vm524 = vcmp.lt.s32.totalorder %v504, 2
        %vm525 = vcmp.lt.s32.totalorder %v504, 3
        %vm526 = vcmp.lt.s32.totalorder %v504, 4
        %v527 = vsel %vm523, %v507, %v510
        %v528 = vsel %vm526, %v516, 2102212464
        %v529 = vsel %vm525, %v513, %v528
        %v530 = vsel %vm524, %v527, %v529
        %v531 = vsel %vm523, %v510, %v513
        %v532 = vsel %vm526, %v519, 920167782
        %v533 = vsel %vm525, %v516, %v532
        %v534 = vsel %vm524, %v531, %v533
        %v535 = vsel %vm523, %v513, %v516
        %v536 = vsel %vm526, %v522, 1326507024
        %v537 = vsel %vm525, %v519, %v536
        %v538 = vsel %vm524, %v535, %v537
        %v539 = vshll.u32 %v499, 8
        %v540 = vand.u32 %v539, 65535
        %v541 = vshrl.u32 %v539, 16
        %v542 = vand.u32 %v538, 65535
        %v543 = vshrl.u32 %v538, 16
        %v544 = vmul.u32 %v540, %v542
        %v545 = vmul.u32 %v540, %v543
        %v546 = vmul.u32 %v541, %v542
        %v547 = vmul.u32 %v541, %v543
        %v548 = vshll.u32 %v545, 16
        %v549 = vshrl.u32 %v545, 16
        %v550 = vshll.u32 %v546, 16
        %v551 = vshrl.u32 %v546, 16
        %vm552 = vc.u32 %v544, %v548
        %v553 = vsel %vm552, 1, 0
        %v554 = vadd.s32 %v544, %v548
        %v555 = vadd.s32 %v547, %v553
        %vm556 = vc.u32 %v554, %v550
        %v557 = vsel %vm556, 1, 0
        %v558 = vadd.s32 %v554, %v550
        %v559 = vadd.s32 %v555, %v557
        %v560 = vadd.s32 %v559, %v549
        %v561 = vadd.s32 %v560, %v551
        %v562 = vand.u32 %v539, 65535
        %v563 = vshrl.u32 %v539, 16
        %v564 = vand.u32 %v534, 65535
        %v565 = vshrl.u32 %v534, 16
        %v566 = vmul.u32 %v562, %v564
        %v567 = vmul.u32 %v562, %v565
        %v568 = vmul.u32 %v563, %v564
        %v569 = vmul.u32 %v563, %v565
        %v570 = vshll.u32 %v567, 16
        %v571 = vshrl.u32 %v567, 16
        %v572 = vshll.u32 %v568, 16
        %v573 = vshrl.u32 %v568, 16
        %vm574 = vc.u32 %v566, %v570
        %v575 = vsel %vm574, 1, 0
        %v576 = vadd.s32 %v566, %v570
        %v577 = vadd.s32 %v569, %v575
        %vm578 = vc.u32 %v576, %v572
        %v579 = vsel %vm578, 1, 0
        %v580 = vadd.s32 %v576, %v572
        %v581 = vadd.s32 %v577, %v579
        %v582 = vadd.s32 %v581, %v571
        %v583 = vadd.s32 %v582, %v573
        %v584 = vmul.u32 %v539, %v530
        %v585 = vadd.s32 %v561, %v580
        %vm586 = vc.u32 %v561, %v580
        %v587 = vadd.s32 %v583, 1
        %v588 = vsel %vm586, %v587, %v583
        %v589 = vadd.s32 %v584, %v588
        %v590 = vadd.s32 %v589, 536870912
        %v591 = vshrl.u32 %v590, 30
        %v592 = vshll.u32 %v591, 30
        %v593 = vsub.s32 %v589, %v592
        %vm594 = vcmp.lt.s32.totalorder %v593, 0
        %v595 = vsub.s32 0, %v593
        %v596 = vsel %vm594, %v595, %v593
        %v597 = vclz %v596
        %v598 = vsub.s32 %v597, 2
        %vm599 = vcmp.gt.s32.totalorder 0, %v598
        %v600 = vsel %vm599, 0, %v598
        %v601 = vsub.s32 32, %v600
        %v602 = vshll.u32 %v593, %v600
        %v603 = vshrl.u32 %v585, %v601
        %v604 = vor.u32 %v602, %v603
        %v605 = vsub.s32 4294967266, %v600
        %v606 = vadd.s32 %v605, 127
        %v607 = vshll.u32 %v606, 23
        %v608 = vor.u32 4788187, %v607
        %v609 = vand.u32 2147483647, %v608
        %v611 = vcvt.s32.f32 %v604
        %v612 = vmul.f32 %v611, %v609
        %v613 = vxor.u32 %v612, 2147483648
        %v614 = vsel %vm493, %v613, %v612
        %v615 = vsub.s32 4, %v591
        %v616 = vsel %vm493, %v615, %v591
        %v617 = vsel %vm492, %v335, %v614
        %v618 = vsel %vm492, 0, %v616
        %v619 = vmul.f32 %v617, %v617
        %v620 = vmul.f32 %v619, -0.001358992
        %v621 = vadd.f32 %v620, 0.041655596
        %v622 = vmul.f32 %v619, %v621
        %v623 = vadd.f32 %v622, -0.4999988
        %v624 = vmul.f32 %v619, %v623
        %v625 = vadd.f32 1.0, %v624
        %v626 = vmul.f32 %v617, %v617
        %v627 = vmul.f32 %v626, -0.00019511016
        %v628 = vadd.f32 %v627, 0.008332121
        %v629 = vmul.f32 %v626, %v628
        %v630 = vadd.f32 %v629, -0.16666654
        %v631 = vmul.f32 %v626, %v630
        %v632 = vadd.f32 %v631, 1.0
        %v633 = vmul.f32 %v632, %v617
        %vm634 = vweird.f32 %v335
        %v635 = vadd.s32 %v618, 3
        %v636 = vand.u32 %v635, 3
        %vm637 = vcmp.lt.s32.totalorder %v636, 2
        %vm638 = vcmp.eq.s32.totalorder %v636, 0
        %v639 = vxor.u32 %v633, 2147483648
        %v640 = vsel %vm638, %v625, %v639
        %vm641 = vcmp.eq.s32.totalorder %v636, 2
        %v642 = vxor.u32 %v625, 2147483648
        %v643 = vsel %vm641, %v642, %v633
        %v644 = vsel %vm637, %v640, %v643
        %v645 = vsel %vm634, nan, %v644
        %v646 = vpack.c.bf16 %v645, %v645
        %v647 = vld [vmem:[#allocation2] sm:$0xf]
        %v648 = vld [vmem:[#allocation2 + $0x4] sm:$0xf]
        %v649 = vld [vmem:[#allocation2 + $0x8] sm:$0xf]
        %v650 = vld [vmem:[#allocation2 + $0xc] sm:$0xf]
        %v651 = vld [vmem:[#allocation2 + $0x10] sm:$0xf]
        %v652 = vld [vmem:[#allocation2 + $0x14] sm:$0xf]
        %v653 = vld [vmem:[#allocation2 + $0x18] sm:$0xf]
        %v654 = vld [vmem:[#allocation2 + $0x1c] sm:$0xf]
        %v655 = vld [vmem:[#allocation2 + $0x20] sm:$0xf]
        %v656 = vld [vmem:[#allocation2 + $0x24] sm:$0xf]
        %v657 = vld [vmem:[#allocation2 + $0x28] sm:$0xf]
        %v658 = vld [vmem:[#allocation2 + $0x2c] sm:$0xf]
        %v659 = vld [vmem:[#allocation2 + $0x30] sm:$0xf]
        %v660 = vld [vmem:[#allocation2 + $0x34] sm:$0xf]
        %v661 = vld [vmem:[#allocation2 + $0x38] sm:$0xf]
        %v662 = vld [vmem:[#allocation2 + $0x3c] sm:$0xf]
        %v663 = vld [vmem:[#allocation5] sm:$0xf]
        %v664 = vld [vmem:[#allocation5 + $0x4] sm:$0xf]
        %v665 = vld [vmem:[#allocation5 + $0x8] sm:$0xf]
        %v666 = vld [vmem:[#allocation5 + $0xc] sm:$0xf]
        %v667 = vld [vmem:[#allocation5 + $0x10] sm:$0xf]
        %v668 = vld [vmem:[#allocation5 + $0x14] sm:$0xf]
        %v669 = vld [vmem:[#allocation5 + $0x18] sm:$0xf]
        %v670 = vld [vmem:[#allocation5 + $0x1c] sm:$0xf]
        %v671 = vld [vmem:[#allocation5 + $0x20] sm:$0xf]
        %v672 = vld [vmem:[#allocation5 + $0x24] sm:$0xf]
        %v673 = vld [vmem:[#allocation5 + $0x28] sm:$0xf]
        %v674 = vld [vmem:[#allocation5 + $0x2c] sm:$0xf]
        %v675 = vld [vmem:[#allocation5 + $0x30] sm:$0xf]
        %v676 = vld [vmem:[#allocation5 + $0x34] sm:$0xf]
        %v677 = vld [vmem:[#allocation5 + $0x38] sm:$0xf]
        %v678 = vld [vmem:[#allocation5 + $0x3c] sm:$0xf]
        %v695 = vunpack.c.l.b16 %v663
        %v696 = vunpack.c.l.b16 %v664
        %v697 = vunpack.c.l.b16 %v665
        %v698 = vunpack.c.l.b16 %v666
        %v699 = vunpack.c.l.b16 %v667
        %v700 = vunpack.c.l.b16 %v668
        %v701 = vunpack.c.l.b16 %v669
        %v702 = vunpack.c.l.b16 %v670
        %v703 = vunpack.c.l.b16 %v671
        %v704 = vunpack.c.l.b16 %v672
        %v705 = vunpack.c.l.b16 %v673
        %v706 = vunpack.c.l.b16 %v674
        %v707 = vunpack.c.l.b16 %v675
        %v708 = vunpack.c.l.b16 %v676
        %v709 = vunpack.c.l.b16 %v677
        %v710 = vunpack.c.l.b16 %v678
        %v711 = vpack.c.b16 %v696, %v695
        %v712 = vpack.c.b16 %v698, %v697
        %v713 = vpack.c.b16 %v700, %v699
        %v714 = vpack.c.b16 %v702, %v701
        %v715 = vpack.c.b16 %v704, %v703
        %v716 = vpack.c.b16 %v706, %v705
        %v717 = vpack.c.b16 %v708, %v707
        %v718 = vpack.c.b16 %v710, %v709
        %727 = vmatpush.bf16.msra.mxu0 %v718
        %728 = vmatpush.bf16.msra.mxu0 %v717
        %729 = vmatpush.bf16.msra.mxu0 %v716
        %730 = vmatpush.bf16.msra.mxu0 %v715
        %731 = vmatpush.bf16.msra.mxu0 %v714
        %732 = vmatpush.bf16.msra.mxu0 %v713
        %733 = vmatpush.bf16.msra.mxu0 %v712
        %734 = vmatpush.bf16.msra.mxu0 %v711
        %735 = vmatmul.bf16.gmra.mxu0 %v646
        %v736 = vpop.f32.mrf.mxu0
        %v737 = vadd.f32 0.0, %v736
        %v738 = vpop.f32.mrf.mxu0
        %739 = vdwg.mxu0
        %v756 = vunpack.c.l.b16 %v647
        %v757 = vunpack.c.l.b16 %v648
        %v758 = vunpack.c.l.b16 %v649
        %v759 = vunpack.c.l.b16 %v650
        %v760 = vunpack.c.l.b16 %v651
        %v761 = vunpack.c.l.b16 %v652
        %v762 = vunpack.c.l.b16 %v653
        %v763 = vunpack.c.l.b16 %v654
        %v764 = vunpack.c.l.b16 %v655
        %v765 = vunpack.c.l.b16 %v656
        %v766 = vunpack.c.l.b16 %v657
        %v767 = vunpack.c.l.b16 %v658
        %v768 = vunpack.c.l.b16 %v659
        %v769 = vunpack.c.l.b16 %v660
        %v770 = vunpack.c.l.b16 %v661
        %v771 = vunpack.c.l.b16 %v662
        %v772 = vpack.c.b16 %v757, %v756
        %v773 = vpack.c.b16 %v759, %v758
        %v774 = vpack.c.b16 %v761, %v760
        %v775 = vpack.c.b16 %v763, %v762
        %v776 = vpack.c.b16 %v765, %v764
        %v777 = vpack.c.b16 %v767, %v766
        %v778 = vpack.c.b16 %v769, %v768
        %v779 = vpack.c.b16 %v771, %v770
        %788 = vmatpush.bf16.msra.mxu0 %v779
        %789 = vmatpush.bf16.msra.mxu0 %v778
        %790 = vmatpush.bf16.msra.mxu0 %v777
        %791 = vmatpush.bf16.msra.mxu0 %v776
        %792 = vmatpush.bf16.msra.mxu0 %v775
        %793 = vmatpush.bf16.msra.mxu0 %v774
        %794 = vmatpush.bf16.msra.mxu0 %v773
        %795 = vmatpush.bf16.msra.mxu0 %v772
        %796 = vmatmul.bf16.gmra.mxu0 %v490
        %v797 = vpop.f32.mrf.mxu0
        %v798 = vadd.f32 %v737, %v797
        %v799 = vpop.f32.mrf.mxu0
        %800 = vdwg.mxu0
        %v801 = vld [vmem:[%s4] sm:$0x1]
        %v803 = vperm.slane %v801, 0
        %v805 = vadd.f32 %v798, %v803
        %v806 = vpack.c.bf16 %v805, %v805
        %v807 = vxor.u32 %v806, 2147516416
        %v808 = vunpack.c.l.bf16 %v807
        %v809 = vmul.f32 %v808, 1.442695
        %v810 = vpow.pop %v809
        %v811 = vpack.c.bf16 %v810, %v810
        %v812 = vunpack.c.l.bf16 %v811
        %v813 = vadd.f32 %v812, 1.0
        %v814 = vpack.c.bf16 %v813, %v813
        %v815 = vunpack.c.h.bf16 1065369472
        %v816 = vunpack.c.l.bf16 1065369472
        %v817 = vunpack.c.h.bf16 %v814
        %v818 = vunpack.c.l.bf16 %v814
        %v819 = vrcp.pop %v817
        %v820 = vmul.f32 %v815, %v819
        %v821 = vrcp.pop %v818
        %v822 = vmul.f32 %v816, %v821
        %v823 = vpack.c.bf16 %v820, %v822
        %v824 = vunpack.c.l.bf16 %v806
        %v825 = vunpack.c.l.bf16 %v823
        %v826 = vmul.f32 %v824, %v825
        %v827 = vpack.c.bf16 %v826, %v826
        %v828 = vld [vmem:[#allocation7] sm:$0xf]
        %v829 = vld [vmem:[#allocation7 + $0x4] sm:$0xf]
        %v830 = vld [vmem:[#allocation7 + $0x8] sm:$0xf]
        %v831 = vld [vmem:[#allocation7 + $0xc] sm:$0xf]
        %v832 = vld [vmem:[#allocation7 + $0x10] sm:$0xf]
        %v833 = vld [vmem:[#allocation7 + $0x14] sm:$0xf]
        %v834 = vld [vmem:[#allocation7 + $0x18] sm:$0xf]
        %v835 = vld [vmem:[#allocation7 + $0x1c] sm:$0xf]
        %v836 = vld [vmem:[#allocation7 + $0x20] sm:$0xf]
        %v837 = vld [vmem:[#allocation7 + $0x24] sm:$0xf]
        %v838 = vld [vmem:[#allocation7 + $0x28] sm:$0xf]
        %v839 = vld [vmem:[#allocation7 + $0x2c] sm:$0xf]
        %v840 = vld [vmem:[#allocation7 + $0x30] sm:$0xf]
        %v841 = vld [vmem:[#allocation7 + $0x34] sm:$0xf]
        %v842 = vld [vmem:[#allocation7 + $0x38] sm:$0xf]
        %v843 = vld [vmem:[#allocation7 + $0x3c] sm:$0xf]
        %v844 = vld [vmem:[%s6] sm:$0x1]
        %v846 = vperm.slane %v844, 0
        %v864 = vunpack.c.l.b16 %v828
        %v865 = vunpack.c.l.b16 %v829
        %v866 = vunpack.c.l.b16 %v830
        %v867 = vunpack.c.l.b16 %v831
        %v868 = vunpack.c.l.b16 %v832
        %v869 = vunpack.c.l.b16 %v833
        %v870 = vunpack.c.l.b16 %v834
        %v871 = vunpack.c.l.b16 %v835
        %v872 = vunpack.c.l.b16 %v836
        %v873 = vunpack.c.l.b16 %v837
        %v874 = vunpack.c.l.b16 %v838
        %v875 = vunpack.c.l.b16 %v839
        %v876 = vunpack.c.l.b16 %v840
        %v877 = vunpack.c.l.b16 %v841
        %v878 = vunpack.c.l.b16 %v842
        %v879 = vunpack.c.l.b16 %v843
        %v880 = vpack.c.b16 %v865, %v864
        %v881 = vpack.c.b16 %v867, %v866
        %v882 = vpack.c.b16 %v869, %v868
        %v883 = vpack.c.b16 %v871, %v870
        %v884 = vpack.c.b16 %v873, %v872
        %v885 = vpack.c.b16 %v875, %v874
        %v886 = vpack.c.b16 %v877, %v876
        %v887 = vpack.c.b16 %v879, %v878
        %896 = vmatpush.bf16.msra.mxu0 %v887
        %897 = vmatpush.bf16.msra.mxu0 %v886
        %898 = vmatpush.bf16.msra.mxu0 %v885
        %899 = vmatpush.bf16.msra.mxu0 %v884
        %900 = vmatpush.bf16.msra.mxu0 %v883
        %901 = vmatpush.bf16.msra.mxu0 %v882
        %902 = vmatpush.bf16.msra.mxu0 %v881
        %903 = vmatpush.bf16.msra.mxu0 %v880
        %904 = vmatmul.bf16.gmra.mxu0 %v827
        %v905 = vpop.f32.mrf.mxu0
        %v906 = vadd.f32 %v846, %v905
        %v907 = vpop.f32.mrf.mxu0
        %908 = vdwg.mxu0
        %909 = vst [vmem:[%s319] sm:$0xff] %v906
        %s910 = sand.u32 %s183, 1
        %s911 = scalar_lea.sflag [#allocation4], %s910
        %s912 = sand.u32 %s183, 1
        %s913 = smul.addr %s912, 8
        %s914 = scalar_lea.vmem [#allocation8], %s913
        // Predicated region
        $region61: #{tpu_custom_call.1} parent=47 // pred_check
          %p915 = pneg %p193
        $region62: #{tpu_custom_call.1} parent=47 // pred_check_branch
          %917 = sbr.rel (%p915) target = $region64
        $region63: #{tpu_custom_call.1} parent=47 // pred_region
          %919 = vsyncadd %s911, 0
          %s920 = smul.addr %s23, 8
          %s921 = scalar_lea.hbm %s7, %s920
          %s923 = sshll.u32 %s914, 4
          %s924 = int_to_ptr.vmem [resolvable:$true] %s923
          %s925 = sshll.u32 %s921, 4
          %s926 = int_to_ptr.hbm [resolvable:$true] %s925
          %928 = dma.vmem_to_hbm [thread:$0]  %s924, 128, %s926, %s911
        $region64: #{tpu_custom_call.1} parent=47 // pred_fallthru
          _
      $region48: #{tpu_custom_call.1} parent=5 // pred_fallthru
        _
      %p929 = scmp.le.s32.totalorder 2, %s18
      // Predicated region
      $region65: #{tpu_custom_call.1} parent=5 // pred_check
        %p930 = pneg %p929
      $region66: #{tpu_custom_call.1} parent=5 // pred_check_branch
        %932 = sbr.rel (%p930) target = $region68
      $region67: #{tpu_custom_call.1} parent=5 // pred_region
        %s933 = ssub.s32 %s18, 2
        // Predicated region
        $region69: #{tpu_custom_call.1} parent=67 // pred_check
          %p934 = pneg %p199
        $region70: #{tpu_custom_call.1} parent=67 // pred_check_branch
          %936 = sbr.rel (%p934) target = $region72
        $region71: #{tpu_custom_call.1} parent=67 // pred_region
          %s937 = sand.u32 %s184, 1
          %s938 = scalar_lea.sflag [#allocation4], %s937
          %s939 = sand.u32 %s184, 1
          %s940 = smul.addr %s939, 8
          %s941 = scalar_lea.vmem [#allocation8], %s940
          %943 = dma.done %s938, 128
        $region72: #{tpu_custom_call.1} parent=67 // pred_fallthru
          _
      $region68: #{tpu_custom_call.1} parent=5 // pred_fallthru
        _
    $region6: #{tpu_custom_call.1} parent=1 // loop_footer
      %s22 = sadd.s32 1, %s18
    $region7: #{tpu_custom_call.1} parent=1 // loop_footer_branch
      %17 = sbr.rel target = $region3
    $region8: #{tpu_custom_call.1} parent=1 // loop_exit
      _
    %944 = vsyncpa [#allocation3], 1
    %s945 = scalar_lea.sflag [#allocation3], 1
    %946 = vsyncpa %s945, 1
    %947 = vsyncpa [#allocation6], 1
    %948 = vsyncpa [#allocation4], 1
    %s949 = scalar_lea.sflag [#allocation4], 1
    %950 = vsyncpa %s949, 1

</llo_original>
